<compile_context>
chip_gen: v6e
topology: v6e:2x2x1
jax: 0.10.0
libtpu: 0.0.40
codegen_flags: <defaults>
</compile_context>

<pallas_src>
import jax
import jax.numpy as jnp
from jax.experimental import pallas as pl
from jax.experimental.pallas import tpu as pltpu

_SCALE = 256.0        # Q8.8 fixed point
_QMIN = -32768.0
_QMAX = 32767.0


def _q(x):
    """Fake quantization to Q8.8 (straight-through in the PyTorch module)."""
    return jnp.clip(jnp.round(x * _SCALE), _QMIN, _QMAX) * (1.0 / _SCALE)


def _sigmoid_approx(x):
    # hard sigmoid: clip(0.25*x + 0.5, 0, 1)
    return jnp.clip(0.25 * x + 0.5, 0.0, 1.0)


def _tanh_approx(x):
    # hard tanh: clip(x, -1, 1)
    return jnp.clip(x, -1.0, 1.0)


def _round_up(n, m):
    return ((n + m - 1) // m) * m


# ---------------------------------------------------------------------------
# Fused GRU kernel: one grid step == one timestep.
# ---------------------------------------------------------------------------
def _gru_kernel(x_ref, wih_ref, bih_ref, whh_ref, bhh_ref,
                w1_ref, b1_ref, w2_ref, b2_ref, out_ref, h_ref):
    t = pl.program_id(0)

    @pl.when(t == 0)
    def _():
        h_ref[...] = jnp.zeros_like(h_ref)        # h0 = zeros

    Hp = whh_ref.shape[0]                         # padded hidden width (multiple of 128)

    # ---- input -> hidden (K == 1, so this is a broadcasted multiply on VPU)
    x = x_ref[0]                                  # (Bp, 1)
    ii = _q(x * wih_ref[...])                     # (Bp, 3*Hp)
    ii = _q(ii + bih_ref[...])

    # ---- hidden -> hidden (single gate-concatenated MXU matmul)
    h = h_ref[...]                                # (Bp, Hp)
    hh = _q(jnp.dot(h, whh_ref[...], preferred_element_type=jnp.float32))
    hh = _q(hh + bhh_ref[...])

    # ---- gates (static, 128-aligned lane slices)
    rt = _q(_sigmoid_approx(ii[:, 0:Hp] + hh[:, 0:Hp]))
    zt = _q(_sigmoid_approx(ii[:, Hp:2 * Hp] + hh[:, Hp:2 * Hp]))
    nt = _q(_tanh_approx(ii[:, 2 * Hp:3 * Hp] + rt * hh[:, 2 * Hp:3 * Hp]))
    h_new = _q((1.0 - zt) * nt + zt * h)
    h_ref[...] = h_new                            # carried to the next timestep

    # ---- FCNN head: q(linear2(relu(q(linear1(h)))))
    y1 = _q(jnp.dot(h_new, w1_ref[...], preferred_element_type=jnp.float32))
    y1 = _q(y1 + b1_ref[...])
    y1 = _q(y1)                                   # outer QuantizeTensor (idempotent, kept for fidelity)
    y1 = jnp.maximum(y1, 0.0)                     # relu
    y2 = _q(jnp.dot(y1, w2_ref[...], preferred_element_type=jnp.float32))
    y2 = _q(y2 + b2_ref[...])
    y2 = _q(y2)
    out_ref[0] = y2                               # lane-dense (Bp, 128) store


# ---------------------------------------------------------------------------
# One-time parameter preparation (transpose / gate-concat / pad) — hoisted out
# of the recurrence entirely.
# ---------------------------------------------------------------------------
def prepare_params(w_ih, w_hh, b_ih, b_hh, w1, b1, w2, b2, hidden_size):
    H = hidden_size
    F = H // 2
    Hp = _round_up(H, 128)
    Fp = _round_up(F, 128)
    Op = _round_up(1, 128)
    G3 = 3 * Hp

    def pack_gate_row(v):
        # v: (3H,) -> (1, 3*Hp) with each gate's H entries at a 128-aligned offset.
        row = jnp.zeros((1, G3), jnp.float32)
        for g in range(3):
            row = row.at[0, g * Hp:g * Hp + H].set(v[g * H:(g + 1) * H])
        return row

    wih_row = pack_gate_row(w_ih.reshape(3 * H))     # input size is 1 -> W_ih.T is a row
    bih_row = pack_gate_row(b_ih.reshape(3 * H))
    bhh_row = pack_gate_row(b_hh.reshape(3 * H))

    whh_t = jnp.zeros((Hp, G3), jnp.float32)
    whh_T = w_hh.T                                   # (H, 3H), transposed ONCE
    for g in range(3):
        whh_t = whh_t.at[:H, g * Hp:g * Hp + H].set(whh_T[:, g * H:(g + 1) * H])

    w1_t = jnp.zeros((Hp, Fp), jnp.float32).at[:H, :F].set(w1.T)
    b1_row = jnp.zeros((1, Fp), jnp.float32).at[0, :F].set(b1)
    w2_t = jnp.zeros((Fp, Op), jnp.float32).at[:F, :1].set(w2.T)
    b2_row = jnp.zeros((1, Op), jnp.float32).at[0, :1].set(b2)

    return dict(H=H, Hp=Hp, Fp=Fp, Op=Op,
                wih_row=wih_row, bih_row=bih_row, whh_t=whh_t, bhh_row=bhh_row,
                w1_t=w1_t, b1_row=b1_row, w2_t=w2_t, b2_row=b2_row)


def quantized_gru_forward(x, p):
    """x: (T, B, 1) f32 -> (T, B, 1) f32."""
    T, B, _ = x.shape
    Hp, Fp, Op = p["Hp"], p["Fp"], p["Op"]
    G3 = 3 * Hp
    Bp = _round_up(B, 8)
    xp = jnp.zeros((T, Bp, 1), jnp.float32).at[:, :B, :].set(x.astype(jnp.float32))

    resident = lambda t: (0, 0)   # same block every step -> DMA'd once, stays in VMEM

    out_padded = pl.pallas_call(
        _gru_kernel,
        out_shape=jax.ShapeDtypeStruct((T, Bp, Op), jnp.float32),
        grid=(T,),
        in_specs=[
            pl.BlockSpec((1, Bp, 1), lambda t: (t, 0, 0)),   # x_t
            pl.BlockSpec((1, G3), resident),                 # W_ih row (gate-blocked)
            pl.BlockSpec((1, G3), resident),                 # b_ih
            pl.BlockSpec((Hp, G3), resident),                # W_hh^T (gate-blocked)
            pl.BlockSpec((1, G3), resident),                 # b_hh
            pl.BlockSpec((Hp, Fp), resident),                # W1^T
            pl.BlockSpec((1, Fp), resident),                 # b1
            pl.BlockSpec((Fp, Op), resident),                # W2^T
            pl.BlockSpec((1, Op), resident),                 # b2
        ],
        out_specs=pl.BlockSpec((1, Bp, Op), lambda t: (t, 0, 0)),
        scratch_shapes=[pltpu.VMEM((Bp, Hp), jnp.float32)],  # hidden-state carry
        compiler_params=pltpu.CompilerParams(
            dimension_semantics=("arbitrary",)),             # recurrence: time is sequential
    )(xp, p["wih_row"], p["bih_row"], p["whh_t"], p["bhh_row"],
      p["w1_t"], p["b1_row"], p["w2_t"], p["b2_row"])

    return out_padded[:, :B, :1]


# ---------------------------------------------------------------------------
# Pure-JAX reference mirroring the PyTorch forward (unpadded).
# ---------------------------------------------------------------------------
def quantized_gru_ref(x, w_ih, w_hh, b_ih, b_hh, w1, b1, w2, b2, H):
    T, B, _ = x.shape
    bihr = b_ih.reshape(1, 3 * H)
    bhhr = b_hh.reshape(1, 3 * H)
    h = jnp.zeros((B, H), jnp.float32)
    outs = []
    for t in range(T):
        xt = x[t]
        ii = _q(xt @ w_ih.T)
        ii = _q(ii + bihr)
        hh = _q(h @ w_hh.T)
        hh = _q(hh + bhhr)
        rt = _q(_sigmoid_approx(ii[:, 0:H] + hh[:, 0:H]))
        zt = _q(_sigmoid_approx(ii[:, H:2 * H] + hh[:, H:2 * H]))
        nt = _q(_tanh_approx(ii[:, 2 * H:3 * H] + rt * hh[:, 2 * H:3 * H]))
        h = _q((1.0 - zt) * nt + zt * h)
        y1 = _q(h @ w1.T)
        y1 = _q(y1 + b1)
        y1 = _q(y1)
        y1 = jnp.maximum(y1, 0.0)
        y2 = _q(y1 @ w2.T)
        y2 = _q(y2 + b2)
        y2 = _q(y2)
        outs.append(y2)
    return jnp.stack(outs, axis=0)   # (T, B, 1)


if __name__ == "__main__":
    # Small shapes consistent with the module defaults: hidden_size=12, input feature = 1.
    T, B, H = 8, 4, 12
    F = H // 2

    key = jax.random.PRNGKey(0)
    ks = jax.random.split(key, 9)
    x = jax.random.normal(ks[0], (T, B, 1), dtype=jnp.float32)

    # Parameters are themselves quantized at init, matching the weights-dict path of the module.
    w_ih = _q(jax.random.normal(ks[1], (3 * H, 1), dtype=jnp.float32) * 0.1)
    w_hh = _q(jax.random.normal(ks[2], (3 * H, H), dtype=jnp.float32) * 0.1)
    b_ih = _q(jax.random.normal(ks[3], (3 * H, 1), dtype=jnp.float32) * 0.1)
    b_hh = _q(jax.random.normal(ks[4], (3 * H, 1), dtype=jnp.float32) * 0.1)
    w1 = _q(jax.random.normal(ks[5], (F, H), dtype=jnp.float32) * 0.1)
    b1 = _q(jax.random.normal(ks[6], (F,), dtype=jnp.float32) * 0.1)
    w2 = _q(jax.random.normal(ks[7], (1, F), dtype=jnp.float32) * 0.1)
    b2 = _q(jax.random.normal(ks[8], (1,), dtype=jnp.float32) * 0.1)

    params = prepare_params(w_ih, w_hh, b_ih, b_hh, w1, b1, w2, b2, H)

    out = quantized_gru_forward(x, params)
    out = jax.block_until_ready(out)

    ref = quantized_gru_ref(x, w_ih, w_hh, b_ih, b_hh, b_ih * 0 + b_ih, b1, w2, b2, H) \
        if False else quantized_gru_ref(x, w_ih, w_hh, b_ih, b_hh, w1, b1, w2, b2, H)

    assert out.shape == (T, B, 1)
    # Tolerance allows at most ~1 quantization step (1/256) of divergence from
    # matmul rounding-order differences; logic errors are far larger.
    assert jnp.allclose(out, ref, atol=5e-3, rtol=0.0), "mismatch vs reference"

    print("KERNEL_OK")
</pallas_src>

<mosaic_0001>
module attributes {stable_mosaic.version = 11 : i64} {
  func.func @_gru_kernel(%arg0: i32, %arg1: memref<1x8x1xf32, #tpu.memory_space<vmem>>, %arg2: memref<1x384xf32, #tpu.memory_space<vmem>>, %arg3: memref<1x384xf32, #tpu.memory_space<vmem>>, %arg4: memref<128x384xf32, #tpu.memory_space<vmem>>, %arg5: memref<1x384xf32, #tpu.memory_space<vmem>>, %arg6: memref<128x128xf32, #tpu.memory_space<vmem>>, %arg7: memref<1x128xf32, #tpu.memory_space<vmem>>, %arg8: memref<128x128xf32, #tpu.memory_space<vmem>>, %arg9: memref<1x128xf32, #tpu.memory_space<vmem>>, %arg10: memref<1x8x128xf32, #tpu.memory_space<vmem>>, %arg11: memref<8x128xf32, #tpu.memory_space<vmem>>) attributes {dimension_semantics = [#tpu.dimension_semantics<arbitrary>], iteration_bounds = array<i64: 8>, scalar_prefetch = 0 : i64, scratch_operands = 1 : i64, tpu.core_type = #tpu.core_type<tc>, window_params = [{transform_indices = @transform_0, window_bounds = array<i64: 1, 8, 1>}, {pipeline_mode = #tpu.pipeline_mode<synchronous>, transform_indices = @transform_1, window_bounds = array<i64: 1, 384>}, {pipeline_mode = #tpu.pipeline_mode<synchronous>, transform_indices = @transform_2, window_bounds = array<i64: 1, 384>}, {pipeline_mode = #tpu.pipeline_mode<synchronous>, transform_indices = @transform_3, window_bounds = array<i64: 128, 384>}, {pipeline_mode = #tpu.pipeline_mode<synchronous>, transform_indices = @transform_4, window_bounds = array<i64: 1, 384>}, {pipeline_mode = #tpu.pipeline_mode<synchronous>, transform_indices = @transform_5, window_bounds = array<i64: 128, 128>}, {pipeline_mode = #tpu.pipeline_mode<synchronous>, transform_indices = @transform_6, window_bounds = array<i64: 1, 128>}, {pipeline_mode = #tpu.pipeline_mode<synchronous>, transform_indices = @transform_7, window_bounds = array<i64: 128, 128>}, {pipeline_mode = #tpu.pipeline_mode<synchronous>, transform_indices = @transform_8, window_bounds = array<i64: 1, 128>}, {transform_indices = @transform_9, window_bounds = array<i64: 1, 8, 128>}]} {
    %c0_i32 = arith.constant 0 : i32
    %0 = arith.cmpi eq, %arg0, %c0_i32 : i32
    %1 = arith.extui %0 : i1 to i32
    %c0_i32_0 = arith.constant 0 : i32
    %2 = arith.cmpi ne, %1, %c0_i32_0 : i32
    scf.if %2 {
      %cst_96 = arith.constant 0.000000e+00 : f32
      %195 = vector.broadcast %cst_96 : f32 to vector<8x128xf32>
      %c0_97 = arith.constant 0 : index
      %c0_98 = arith.constant 0 : index
      %196 = vector.load %arg11[%c0_97, %c0_98] : memref<8x128xf32, #tpu.memory_space<vmem>>, vector<8x128xf32>
      tpu.vector_store %arg11[%c0_97, %c0_98], %195 {strides = array<i32>} : memref<8x128xf32, #tpu.memory_space<vmem>>, vector<8x128xf32>,
    } else {
    }
    %c0 = arith.constant 0 : index
    %c0_1 = arith.constant 0 : index
    %c0_2 = arith.constant 0 : index
    %3 = vector.load %arg1[%c0, %c0_1, %c0_2] : memref<1x8x1xf32, #tpu.memory_space<vmem>>, vector<1x8x1xf32>
    %4 = vector.shape_cast %3 : vector<1x8x1xf32> to vector<8x1xf32>
    %c0_3 = arith.constant 0 : index
    %c0_4 = arith.constant 0 : index
    %5 = vector.load %arg2[%c0_3, %c0_4] : memref<1x384xf32, #tpu.memory_space<vmem>>, vector<1x384xf32>
    %6 = vector.broadcast %4 : vector<8x1xf32> to vector<8x384xf32>
    %7 = vector.broadcast %5 : vector<1x384xf32> to vector<8x384xf32>
    %8 = arith.mulf %6, %7 : vector<8x384xf32>
    %cst = arith.constant 2.560000e+02 : f32
    %9 = vector.broadcast %cst : f32 to vector<8x384xf32>
    %10 = arith.mulf %8, %9 : vector<8x384xf32>
    %11 = math.roundeven %10 : vector<8x384xf32>
    %cst_5 = arith.constant -3.276800e+04 : f32
    %cst_6 = arith.constant 3.276700e+04 : f32
    %12 = vector.broadcast %cst_5 : f32 to vector<8x384xf32>
    %13 = arith.maximumf %12, %11 : vector<8x384xf32>
    %14 = vector.broadcast %cst_6 : f32 to vector<8x384xf32>
    %15 = arith.minimumf %14, %13 : vector<8x384xf32>
    %cst_7 = arith.constant 3.906250e-03 : f32
    %16 = vector.broadcast %cst_7 : f32 to vector<8x384xf32>
    %17 = arith.mulf %15, %16 : vector<8x384xf32>
    %c0_8 = arith.constant 0 : index
    %c0_9 = arith.constant 0 : index
    %18 = vector.load %arg3[%c0_8, %c0_9] : memref<1x384xf32, #tpu.memory_space<vmem>>, vector<1x384xf32>
    %19 = vector.broadcast %18 : vector<1x384xf32> to vector<8x384xf32>
    %20 = arith.addf %17, %19 : vector<8x384xf32>
    %cst_10 = arith.constant 2.560000e+02 : f32
    %21 = vector.broadcast %cst_10 : f32 to vector<8x384xf32>
    %22 = arith.mulf %20, %21 : vector<8x384xf32>
    %23 = math.roundeven %22 : vector<8x384xf32>
    %cst_11 = arith.constant -3.276800e+04 : f32
    %cst_12 = arith.constant 3.276700e+04 : f32
    %24 = vector.broadcast %cst_11 : f32 to vector<8x384xf32>
    %25 = arith.maximumf %24, %23 : vector<8x384xf32>
    %26 = vector.broadcast %cst_12 : f32 to vector<8x384xf32>
    %27 = arith.minimumf %26, %25 : vector<8x384xf32>
    %cst_13 = arith.constant 3.906250e-03 : f32
    %28 = vector.broadcast %cst_13 : f32 to vector<8x384xf32>
    %29 = arith.mulf %27, %28 : vector<8x384xf32>
    %c0_14 = arith.constant 0 : index
    %c0_15 = arith.constant 0 : index
    %30 = vector.load %arg11[%c0_14, %c0_15] : memref<8x128xf32, #tpu.memory_space<vmem>>, vector<8x128xf32>
    %c0_16 = arith.constant 0 : index
    %c0_17 = arith.constant 0 : index
    %31 = vector.load %arg4[%c0_16, %c0_17] : memref<128x384xf32, #tpu.memory_space<vmem>>, vector<128x384xf32>
    %cst_18 = arith.constant dense<0.000000e+00> : vector<8x384xf32>
    %32 = tpu.matmul %30, %31, %cst_18 {dimension_numbers = #tpu.dot_dimension_numbers<[1], [0], [0], [1], [0, 0, 1, 1], [], []>} : vector<8x128xf32>, vector<128x384xf32>, vector<8x384xf32> -> vector<8x384xf32>
    %cst_19 = arith.constant 2.560000e+02 : f32
    %33 = vector.broadcast %cst_19 : f32 to vector<8x384xf32>
    %34 = arith.mulf %32, %33 : vector<8x384xf32>
    %35 = math.roundeven %34 : vector<8x384xf32>
    %cst_20 = arith.constant -3.276800e+04 : f32
    %cst_21 = arith.constant 3.276700e+04 : f32
    %36 = vector.broadcast %cst_20 : f32 to vector<8x384xf32>
    %37 = arith.maximumf %36, %35 : vector<8x384xf32>
    %38 = vector.broadcast %cst_21 : f32 to vector<8x384xf32>
    %39 = arith.minimumf %38, %37 : vector<8x384xf32>
    %cst_22 = arith.constant 3.906250e-03 : f32
    %40 = vector.broadcast %cst_22 : f32 to vector<8x384xf32>
    %41 = arith.mulf %39, %40 : vector<8x384xf32>
    %c0_23 = arith.constant 0 : index
    %c0_24 = arith.constant 0 : index
    %42 = vector.load %arg5[%c0_23, %c0_24] : memref<1x384xf32, #tpu.memory_space<vmem>>, vector<1x384xf32>
    %43 = vector.broadcast %42 : vector<1x384xf32> to vector<8x384xf32>
    %44 = arith.addf %41, %43 : vector<8x384xf32>
    %cst_25 = arith.constant 2.560000e+02 : f32
    %45 = vector.broadcast %cst_25 : f32 to vector<8x384xf32>
    %46 = arith.mulf %44, %45 : vector<8x384xf32>
    %47 = math.roundeven %46 : vector<8x384xf32>
    %cst_26 = arith.constant -3.276800e+04 : f32
    %cst_27 = arith.constant 3.276700e+04 : f32
    %48 = vector.broadcast %cst_26 : f32 to vector<8x384xf32>
    %49 = arith.maximumf %48, %47 : vector<8x384xf32>
    %50 = vector.broadcast %cst_27 : f32 to vector<8x384xf32>
    %51 = arith.minimumf %50, %49 : vector<8x384xf32>
    %cst_28 = arith.constant 3.906250e-03 : f32
    %52 = vector.broadcast %cst_28 : f32 to vector<8x384xf32>
    %53 = arith.mulf %51, %52 : vector<8x384xf32>
    %54 = vector.extract_strided_slice %29 {offsets = [0, 0], sizes = [8, 128], strides = [1, 1]} : vector<8x384xf32> to vector<8x128xf32>
    %55 = vector.extract_strided_slice %53 {offsets = [0, 0], sizes = [8, 128], strides = [1, 1]} : vector<8x384xf32> to vector<8x128xf32>
    %56 = arith.addf %54, %55 : vector<8x128xf32>
    %cst_29 = arith.constant 2.500000e-01 : f32
    %57 = vector.broadcast %cst_29 : f32 to vector<8x128xf32>
    %58 = arith.mulf %57, %56 : vector<8x128xf32>
    %cst_30 = arith.constant 5.000000e-01 : f32
    %59 = vector.broadcast %cst_30 : f32 to vector<8x128xf32>
    %60 = arith.addf %58, %59 : vector<8x128xf32>
    %cst_31 = arith.constant 0.000000e+00 : f32
    %cst_32 = arith.constant 1.000000e+00 : f32
    %61 = vector.broadcast %cst_31 : f32 to vector<8x128xf32>
    %62 = arith.maximumf %61, %60 : vector<8x128xf32>
    %63 = vector.broadcast %cst_32 : f32 to vector<8x128xf32>
    %64 = arith.minimumf %63, %62 : vector<8x128xf32>
    %cst_33 = arith.constant 2.560000e+02 : f32
    %65 = vector.broadcast %cst_33 : f32 to vector<8x128xf32>
    %66 = arith.mulf %64, %65 : vector<8x128xf32>
    %67 = math.roundeven %66 : vector<8x128xf32>
    %cst_34 = arith.constant -3.276800e+04 : f32
    %cst_35 = arith.constant 3.276700e+04 : f32
    %68 = vector.broadcast %cst_34 : f32 to vector<8x128xf32>
    %69 = arith.maximumf %68, %67 : vector<8x128xf32>
    %70 = vector.broadcast %cst_35 : f32 to vector<8x128xf32>
    %71 = arith.minimumf %70, %69 : vector<8x128xf32>
    %cst_36 = arith.constant 3.906250e-03 : f32
    %72 = vector.broadcast %cst_36 : f32 to vector<8x128xf32>
    %73 = arith.mulf %71, %72 : vector<8x128xf32>
    %74 = vector.extract_strided_slice %29 {offsets = [0, 128], sizes = [8, 128], strides = [1, 1]} : vector<8x384xf32> to vector<8x128xf32>
    %75 = vector.extract_strided_slice %53 {offsets = [0, 128], sizes = [8, 128], strides = [1, 1]} : vector<8x384xf32> to vector<8x128xf32>
    %76 = arith.addf %74, %75 : vector<8x128xf32>
    %cst_37 = arith.constant 2.500000e-01 : f32
    %77 = vector.broadcast %cst_37 : f32 to vector<8x128xf32>
    %78 = arith.mulf %77, %76 : vector<8x128xf32>
    %cst_38 = arith.constant 5.000000e-01 : f32
    %79 = vector.broadcast %cst_38 : f32 to vector<8x128xf32>
    %80 = arith.addf %78, %79 : vector<8x128xf32>
    %cst_39 = arith.constant 0.000000e+00 : f32
    %cst_40 = arith.constant 1.000000e+00 : f32
    %81 = vector.broadcast %cst_39 : f32 to vector<8x128xf32>
    %82 = arith.maximumf %81, %80 : vector<8x128xf32>
    %83 = vector.broadcast %cst_40 : f32 to vector<8x128xf32>
    %84 = arith.minimumf %83, %82 : vector<8x128xf32>
    %cst_41 = arith.constant 2.560000e+02 : f32
    %85 = vector.broadcast %cst_41 : f32 to vector<8x128xf32>
    %86 = arith.mulf %84, %85 : vector<8x128xf32>
    %87 = math.roundeven %86 : vector<8x128xf32>
    %cst_42 = arith.constant -3.276800e+04 : f32
    %cst_43 = arith.constant 3.276700e+04 : f32
    %88 = vector.broadcast %cst_42 : f32 to vector<8x128xf32>
    %89 = arith.maximumf %88, %87 : vector<8x128xf32>
    %90 = vector.broadcast %cst_43 : f32 to vector<8x128xf32>
    %91 = arith.minimumf %90, %89 : vector<8x128xf32>
    %cst_44 = arith.constant 3.906250e-03 : f32
    %92 = vector.broadcast %cst_44 : f32 to vector<8x128xf32>
    %93 = arith.mulf %91, %92 : vector<8x128xf32>
    %94 = vector.extract_strided_slice %29 {offsets = [0, 256], sizes = [8, 128], strides = [1, 1]} : vector<8x384xf32> to vector<8x128xf32>
    %95 = vector.extract_strided_slice %53 {offsets = [0, 256], sizes = [8, 128], strides = [1, 1]} : vector<8x384xf32> to vector<8x128xf32>
    %96 = arith.mulf %73, %95 : vector<8x128xf32>
    %97 = arith.addf %94, %96 : vector<8x128xf32>
    %cst_45 = arith.constant -1.000000e+00 : f32
    %cst_46 = arith.constant 1.000000e+00 : f32
    %98 = vector.broadcast %cst_45 : f32 to vector<8x128xf32>
    %99 = arith.maximumf %98, %97 : vector<8x128xf32>
    %100 = vector.broadcast %cst_46 : f32 to vector<8x128xf32>
    %101 = arith.minimumf %100, %99 : vector<8x128xf32>
    %cst_47 = arith.constant 2.560000e+02 : f32
    %102 = vector.broadcast %cst_47 : f32 to vector<8x128xf32>
    %103 = arith.mulf %101, %102 : vector<8x128xf32>
    %104 = math.roundeven %103 : vector<8x128xf32>
    %cst_48 = arith.constant -3.276800e+04 : f32
    %cst_49 = arith.constant 3.276700e+04 : f32
    %105 = vector.broadcast %cst_48 : f32 to vector<8x128xf32>
    %106 = arith.maximumf %105, %104 : vector<8x128xf32>
    %107 = vector.broadcast %cst_49 : f32 to vector<8x128xf32>
    %108 = arith.minimumf %107, %106 : vector<8x128xf32>
    %cst_50 = arith.constant 3.906250e-03 : f32
    %109 = vector.broadcast %cst_50 : f32 to vector<8x128xf32>
    %110 = arith.mulf %108, %109 : vector<8x128xf32>
    %cst_51 = arith.constant 1.000000e+00 : f32
    %111 = vector.broadcast %cst_51 : f32 to vector<8x128xf32>
    %112 = arith.subf %111, %93 : vector<8x128xf32>
    %113 = arith.mulf %112, %110 : vector<8x128xf32>
    %114 = arith.mulf %93, %30 : vector<8x128xf32>
    %115 = arith.addf %113, %114 : vector<8x128xf32>
    %cst_52 = arith.constant 2.560000e+02 : f32
    %116 = vector.broadcast %cst_52 : f32 to vector<8x128xf32>
    %117 = arith.mulf %115, %116 : vector<8x128xf32>
    %118 = math.roundeven %117 : vector<8x128xf32>
    %cst_53 = arith.constant -3.276800e+04 : f32
    %cst_54 = arith.constant 3.276700e+04 : f32
    %119 = vector.broadcast %cst_53 : f32 to vector<8x128xf32>
    %120 = arith.maximumf %119, %118 : vector<8x128xf32>
    %121 = vector.broadcast %cst_54 : f32 to vector<8x128xf32>
    %122 = arith.minimumf %121, %120 : vector<8x128xf32>
    %cst_55 = arith.constant 3.906250e-03 : f32
    %123 = vector.broadcast %cst_55 : f32 to vector<8x128xf32>
    %124 = arith.mulf %122, %123 : vector<8x128xf32>
    %c0_56 = arith.constant 0 : index
    %c0_57 = arith.constant 0 : index
    %125 = vector.load %arg11[%c0_56, %c0_57] : memref<8x128xf32, #tpu.memory_space<vmem>>, vector<8x128xf32>
    tpu.vector_store %arg11[%c0_56, %c0_57], %124 {strides = array<i32>} : memref<8x128xf32, #tpu.memory_space<vmem>>, vector<8x128xf32>,
    %c0_58 = arith.constant 0 : index
    %c0_59 = arith.constant 0 : index
    %126 = vector.load %arg6[%c0_58, %c0_59] : memref<128x128xf32, #tpu.memory_space<vmem>>, vector<128x128xf32>
    %cst_60 = arith.constant dense<0.000000e+00> : vector<8x128xf32>
    %127 = tpu.matmul %124, %126, %cst_60 {dimension_numbers = #tpu.dot_dimension_numbers<[1], [0], [0], [1], [0, 0, 1, 1], [], []>} : vector<8x128xf32>, vector<128x128xf32>, vector<8x128xf32> -> vector<8x128xf32>
    %cst_61 = arith.constant 2.560000e+02 : f32
    %128 = vector.broadcast %cst_61 : f32 to vector<8x128xf32>
    %129 = arith.mulf %127, %128 : vector<8x128xf32>
    %130 = math.roundeven %129 : vector<8x128xf32>
    %cst_62 = arith.constant -3.276800e+04 : f32
    %cst_63 = arith.constant 3.276700e+04 : f32
    %131 = vector.broadcast %cst_62 : f32 to vector<8x128xf32>
    %132 = arith.maximumf %131, %130 : vector<8x128xf32>
    %133 = vector.broadcast %cst_63 : f32 to vector<8x128xf32>
    %134 = arith.minimumf %133, %132 : vector<8x128xf32>
    %cst_64 = arith.constant 3.906250e-03 : f32
    %135 = vector.broadcast %cst_64 : f32 to vector<8x128xf32>
    %136 = arith.mulf %134, %135 : vector<8x128xf32>
    %c0_65 = arith.constant 0 : index
    %c0_66 = arith.constant 0 : index
    %137 = vector.load %arg7[%c0_65, %c0_66] : memref<1x128xf32, #tpu.memory_space<vmem>>, vector<1x128xf32>
    %138 = vector.broadcast %137 : vector<1x128xf32> to vector<8x128xf32>
    %139 = arith.addf %136, %138 : vector<8x128xf32>
    %cst_67 = arith.constant 2.560000e+02 : f32
    %140 = vector.broadcast %cst_67 : f32 to vector<8x128xf32>
    %141 = arith.mulf %139, %140 : vector<8x128xf32>
    %142 = math.roundeven %141 : vector<8x128xf32>
    %cst_68 = arith.constant -3.276800e+04 : f32
    %cst_69 = arith.constant 3.276700e+04 : f32
    %143 = vector.broadcast %cst_68 : f32 to vector<8x128xf32>
    %144 = arith.maximumf %143, %142 : vector<8x128xf32>
    %145 = vector.broadcast %cst_69 : f32 to vector<8x128xf32>
    %146 = arith.minimumf %145, %144 : vector<8x128xf32>
    %cst_70 = arith.constant 3.906250e-03 : f32
    %147 = vector.broadcast %cst_70 : f32 to vector<8x128xf32>
    %148 = arith.mulf %146, %147 : vector<8x128xf32>
    %cst_71 = arith.constant 2.560000e+02 : f32
    %149 = vector.broadcast %cst_71 : f32 to vector<8x128xf32>
    %150 = arith.mulf %148, %149 : vector<8x128xf32>
    %151 = math.roundeven %150 : vector<8x128xf32>
    %cst_72 = arith.constant -3.276800e+04 : f32
    %cst_73 = arith.constant 3.276700e+04 : f32
    %152 = vector.broadcast %cst_72 : f32 to vector<8x128xf32>
    %153 = arith.maximumf %152, %151 : vector<8x128xf32>
    %154 = vector.broadcast %cst_73 : f32 to vector<8x128xf32>
    %155 = arith.minimumf %154, %153 : vector<8x128xf32>
    %cst_74 = arith.constant 3.906250e-03 : f32
    %156 = vector.broadcast %cst_74 : f32 to vector<8x128xf32>
    %157 = arith.mulf %155, %156 : vector<8x128xf32>
    %cst_75 = arith.constant 0.000000e+00 : f32
    %158 = vector.broadcast %cst_75 : f32 to vector<8x128xf32>
    %159 = arith.maximumf %157, %158 : vector<8x128xf32>
    %c0_76 = arith.constant 0 : index
    %c0_77 = arith.constant 0 : index
    %160 = vector.load %arg8[%c0_76, %c0_77] : memref<128x128xf32, #tpu.memory_space<vmem>>, vector<128x128xf32>
    %cst_78 = arith.constant dense<0.000000e+00> : vector<8x128xf32>
    %161 = tpu.matmul %159, %160, %cst_78 {dimension_numbers = #tpu.dot_dimension_numbers<[1], [0], [0], [1], [0, 0, 1, 1], [], []>} : vector<8x128xf32>, vector<128x128xf32>, vector<8x128xf32> -> vector<8x128xf32>
    %cst_79 = arith.constant 2.560000e+02 : f32
    %162 = vector.broadcast %cst_79 : f32 to vector<8x128xf32>
    %163 = arith.mulf %161, %162 : vector<8x128xf32>
    %164 = math.roundeven %163 : vector<8x128xf32>
    %cst_80 = arith.constant -3.276800e+04 : f32
    %cst_81 = arith.constant 3.276700e+04 : f32
    %165 = vector.broadcast %cst_80 : f32 to vector<8x128xf32>
    %166 = arith.maximumf %165, %164 : vector<8x128xf32>
    %167 = vector.broadcast %cst_81 : f32 to vector<8x128xf32>
    %168 = arith.minimumf %167, %166 : vector<8x128xf32>
    %cst_82 = arith.constant 3.906250e-03 : f32
    %169 = vector.broadcast %cst_82 : f32 to vector<8x128xf32>
    %170 = arith.mulf %168, %169 : vector<8x128xf32>
    %c0_83 = arith.constant 0 : index
    %c0_84 = arith.constant 0 : index
    %171 = vector.load %arg9[%c0_83, %c0_84] : memref<1x128xf32, #tpu.memory_space<vmem>>, vector<1x128xf32>
    %172 = vector.broadcast %171 : vector<1x128xf32> to vector<8x128xf32>
    %173 = arith.addf %170, %172 : vector<8x128xf32>
    %cst_85 = arith.constant 2.560000e+02 : f32
    %174 = vector.broadcast %cst_85 : f32 to vector<8x128xf32>
    %175 = arith.mulf %173, %174 : vector<8x128xf32>
    %176 = math.roundeven %175 : vector<8x128xf32>
    %cst_86 = arith.constant -3.276800e+04 : f32
    %cst_87 = arith.constant 3.276700e+04 : f32
    %177 = vector.broadcast %cst_86 : f32 to vector<8x128xf32>
    %178 = arith.maximumf %177, %176 : vector<8x128xf32>
    %179 = vector.broadcast %cst_87 : f32 to vector<8x128xf32>
    %180 = arith.minimumf %179, %178 : vector<8x128xf32>
    %cst_88 = arith.constant 3.906250e-03 : f32
    %181 = vector.broadcast %cst_88 : f32 to vector<8x128xf32>
    %182 = arith.mulf %180, %181 : vector<8x128xf32>
    %cst_89 = arith.constant 2.560000e+02 : f32
    %183 = vector.broadcast %cst_89 : f32 to vector<8x128xf32>
    %184 = arith.mulf %182, %183 : vector<8x128xf32>
    %185 = math.roundeven %184 : vector<8x128xf32>
    %cst_90 = arith.constant -3.276800e+04 : f32
    %cst_91 = arith.constant 3.276700e+04 : f32
    %186 = vector.broadcast %cst_90 : f32 to vector<8x128xf32>
    %187 = arith.maximumf %186, %185 : vector<8x128xf32>
    %188 = vector.broadcast %cst_91 : f32 to vector<8x128xf32>
    %189 = arith.minimumf %188, %187 : vector<8x128xf32>
    %cst_92 = arith.constant 3.906250e-03 : f32
    %190 = vector.broadcast %cst_92 : f32 to vector<8x128xf32>
    %191 = arith.mulf %189, %190 : vector<8x128xf32>
    %c0_93 = arith.constant 0 : index
    %c0_94 = arith.constant 0 : index
    %c0_95 = arith.constant 0 : index
    %192 = vector.load %arg10[%c0_93, %c0_94, %c0_95] : memref<1x8x128xf32, #tpu.memory_space<vmem>>, vector<1x8x128xf32>
    %193 = vector.shape_cast %192 : vector<1x8x128xf32> to vector<8x128xf32>
    %194 = vector.shape_cast %191 : vector<8x128xf32> to vector<1x8x128xf32>
    tpu.vector_store %arg10[%c0_93, %c0_94, %c0_95], %194 {strides = array<i32>} : memref<1x8x128xf32, #tpu.memory_space<vmem>>, vector<1x8x128xf32>,
    return
  }
  func.func @transform_0(%arg0: i32) -> (i32, i32, i32) {
    %c0_i32 = arith.constant 0 : i32
    %c0_i32_0 = arith.constant 0 : i32
    %c0_i32_1 = arith.constant 0 : i32
    return %arg0, %c0_i32, %c0_i32_0 : i32, i32, i32
  }
  func.func @transform_1(%arg0: i32) -> (i32, i32) {
    %c0_i32 = arith.constant 0 : i32
    %c0_i32_0 = arith.constant 0 : i32
    %c0_i32_1 = arith.constant 0 : i32
    return %c0_i32, %c0_i32_0 : i32, i32
  }
  func.func @transform_2(%arg0: i32) -> (i32, i32) {
    %c0_i32 = arith.constant 0 : i32
    %c0_i32_0 = arith.constant 0 : i32
    %c0_i32_1 = arith.constant 0 : i32
    return %c0_i32, %c0_i32_0 : i32, i32
  }
  func.func @transform_3(%arg0: i32) -> (i32, i32) {
    %c0_i32 = arith.constant 0 : i32
    %c0_i32_0 = arith.constant 0 : i32
    %c0_i32_1 = arith.constant 0 : i32
    return %c0_i32, %c0_i32_0 : i32, i32
  }
  func.func @transform_4(%arg0: i32) -> (i32, i32) {
    %c0_i32 = arith.constant 0 : i32
    %c0_i32_0 = arith.constant 0 : i32
    %c0_i32_1 = arith.constant 0 : i32
    return %c0_i32, %c0_i32_0 : i32, i32
  }
  func.func @transform_5(%arg0: i32) -> (i32, i32) {
    %c0_i32 = arith.constant 0 : i32
    %c0_i32_0 = arith.constant 0 : i32
    %c0_i32_1 = arith.constant 0 : i32
    return %c0_i32, %c0_i32_0 : i32, i32
  }
  func.func @transform_6(%arg0: i32) -> (i32, i32) {
    %c0_i32 = arith.constant 0 : i32
    %c0_i32_0 = arith.constant 0 : i32
    %c0_i32_1 = arith.constant 0 : i32
    return %c0_i32, %c0_i32_0 : i32, i32
  }
  func.func @transform_7(%arg0: i32) -> (i32, i32) {
    %c0_i32 = arith.constant 0 : i32
    %c0_i32_0 = arith.constant 0 : i32
    %c0_i32_1 = arith.constant 0 : i32
    return %c0_i32, %c0_i32_0 : i32, i32
  }
  func.func @transform_8(%arg0: i32) -> (i32, i32) {
    %c0_i32 = arith.constant 0 : i32
    %c0_i32_0 = arith.constant 0 : i32
    %c0_i32_1 = arith.constant 0 : i32
    return %c0_i32, %c0_i32_0 : i32, i32
  }
  func.func @transform_9(%arg0: i32) -> (i32, i32, i32) {
    %c0_i32 = arith.constant 0 : i32
    %c0_i32_0 = arith.constant 0 : i32
    %c0_i32_1 = arith.constant 0 : i32
    return %arg0, %c0_i32, %c0_i32_0 : i32, i32, i32
  }
}

</mosaic_0001>

<llo_original>
// kernel: tpu_custom_call.1
$region0: #{tpu_custom_call.1}
  #allocation0 [shape = 'u32[]', space=smem, size = 0x4, offset = 0x4, fixed_abs, tag = 'smem constant byte address 0x4 - core index']
  #allocation1 [shape = 'u32[144,128]{1,0:T(1,128)}', space=vmem, size = 0x12000, scoped, tag = 'internal scratch']
  #allocation2 [shape = 'f32[8,128]{1,0:T(8,128)}', space=vmem, size = 0x1000, scoped, tag = 'scratch operand']
  %s0 = inlined_call_operand.vmem [shape: f32[8,8,1], index: 0, kind: input, shape index: {}]
  %s1 = inlined_call_operand.vmem [shape: f32[1,384], index: 1, kind: input, shape index: {}]
  %s2 = inlined_call_operand.vmem [shape: f32[1,384], index: 2, kind: input, shape index: {}]
  %s3 = inlined_call_operand.hbm [shape: f32[128,384], index: 3, kind: input, shape index: {}]
  %s4 = inlined_call_operand.vmem [shape: f32[1,384], index: 4, kind: input, shape index: {}]
  %s5 = inlined_call_operand.hbm [shape: f32[128,128], index: 5, kind: input, shape index: {}]
  %s6 = inlined_call_operand.vmem [shape: f32[1,128], index: 6, kind: input, shape index: {}]
  %s7 = inlined_call_operand.hbm [shape: f32[128,128], index: 7, kind: input, shape index: {}]
  %s8 = inlined_call_operand.vmem [shape: f32[1,128], index: 8, kind: input, shape index: {}]
  %s9 = inlined_call_operand.hbm [shape: f32[8,8,128], index: 9, kind: output, shape index: {}]
  %s10 = sld [smem:[#allocation0]]
  $region85: #{tpu_custom_call.1} parent=0
    _
  %s12 = ssub.s32 1, %s10
  %s13 = scalar_select 0, %s12, %s10
  $region1: #{tpu_custom_call.1} parent=0
    #allocation3 [shape = 'u8[196608]{0}', space=vmem, size = 0x30000, scoped, tag = 'input window, operand 3, single buffered']
    #allocation4 [shape = 's32[2]{0}', space=sflag, size = 0x8, scoped, tag = 'scoped memory for tpu_custom_call.1']
    #allocation5 [shape = 's32[2]{0}', space=sflag, size = 0x8, scoped, tag = 'scoped memory for tpu_custom_call.1']
    #allocation6 [shape = 'u8[65536]{0}', space=vmem, size = 0x10000, scoped, tag = 'input window, operand 5, single buffered']
    #allocation7 [shape = 's32[1]{0}', space=sflag, size = 0x4, scoped, tag = 'scoped memory for tpu_custom_call.1']
    #allocation8 [shape = 'u8[65536]{0}', space=vmem, size = 0x10000, scoped, tag = 'input window, operand 7, single buffered']
    #allocation9 [shape = 'u8[8192]{0}', space=vmem, size = 0x2000, scoped, tag = 'output window, operand 0']
    %14 = vsyncpa [#allocation4], 0
    %15 = vsyncpa [#allocation7], 0
    %16 = vsyncpa [#allocation5], 0
    %s17 = scalar_lea.sflag [#allocation5], 1
    %18 = vsyncpa %s17, 0
    loop: start=0, step=1, limit=10
    $region2: #{tpu_custom_call.1} parent=1 // loop_pre_header
      _
    $region3: #{tpu_custom_call.1} parent=1 // loop_header
      %s20 = sphi 0, %s24
      %p21 = scmp.ge.s32.totalorder %s20, 10
      %s30 = sphi 0, %s32
      %s33 = sphi 0, %s30
      %s34 = sphi 0, %s33
      %s50 = sphi 0, %s34
      %s54 = sphi 0, %s54
      %s56 = sphi 0, %s54
      %s57 = sphi 0, %s56
      %s71 = sphi 0, %s57
      %s75 = sphi 0, %s75
      %s77 = sphi 0, %s75
      %s78 = sphi 0, %s77
      %s92 = sphi 0, %s78
      %s96 = sphi 0, %s96
      %s98 = sphi 0, %s96
      %s99 = sphi 0, %s98
      %s113 = sphi 0, %s99
      %s117 = sphi 0, %s117
      %s119 = sphi 0, %s117
      %s120 = sphi 0, %s119
      %s134 = sphi 0, %s120
      %s138 = sphi 0, %s138
      %s140 = sphi 0, %s138
      %s141 = sphi 0, %s140
      %s155 = sphi 0, %s141
      %s159 = sphi 0, %s159
      %s161 = sphi 0, %s159
      %s162 = sphi 0, %s161
      %s176 = sphi 0, %s162
      %s180 = sphi 0, %s180
      %s182 = sphi 0, %s180
      %s183 = sphi 0, %s182
      %s197 = sphi 0, %s183
      %s201 = sphi 0, %s201
      %s203 = sphi 0, %s201
      %s204 = sphi 0, %s203
      %s218 = sphi 0, %s204
      %s224 = sphi 0, %s226
      %s227 = sphi 0, %s224
      %s228 = sphi 0, %s227
      %s244 = sphi 0, %s228
    $region4: #{tpu_custom_call.1} parent=1 // loop_header_branch
      %23 = sbr.rel (%p21) target = $region8
    $region5: #{tpu_custom_call.1} parent=1 // loop_body
      %s25 = ssub.s32 %s20, 1
      %s26 = ssub.s32 %s20, 2
      %s27 = sadd.s32 %s20, 1
      %s28 = ssub.s32 %s20, %s27
      %p29 = scmp.eq.s32.totalorder %s28, 0
      %s31 = sadd.s32 %s30, 1
      %s32 = scalar_select %p29, %s30, %s31
      %p35 = pneg %p29
      %p36 = scmp.eq.s32.totalorder %s20, 7
      %p37 = por %p35, %p36
      %p38 = scmp.ne.s32.totalorder %s30, %s33
      %p39 = scmp.eq.s32.totalorder %s20, 0
      %p40 = por %p38, %p39
      %p41 = scmp.ne.s32.totalorder %s30, %s33
      %p42 = scmp.eq.s32.totalorder %s25, 7
      %p43 = por %p41, %p42
      %p44 = scmp.ne.s32.totalorder %s33, %s34
      %p45 = scmp.eq.s32.totalorder %s25, 0
      %p46 = por %p44, %p45
      %p47 = scmp.ne.s32.totalorder %s33, %s34
      %p48 = scmp.eq.s32.totalorder %s26, 7
      %p49 = por %p47, %p48
      %p51 = scmp.ne.s32.totalorder %s34, %s50
      %p52 = scmp.eq.s32.totalorder %s26, 0
      %p53 = por %p51, %p52
      %s55 = sadd.s32 %s54, 1
      %p58 = scmp.eq.s32.totalorder %s20, 7
      %p59 = scmp.ne.s32.totalorder %s54, %s56
      %p60 = scmp.eq.s32.totalorder %s20, 0
      %p61 = por %p59, %p60
      %p62 = scmp.ne.s32.totalorder %s54, %s56
      %p63 = scmp.eq.s32.totalorder %s25, 7
      %p64 = por %p62, %p63
      %p65 = scmp.ne.s32.totalorder %s56, %s57
      %p66 = scmp.eq.s32.totalorder %s25, 0
      %p67 = por %p65, %p66
      %p68 = scmp.ne.s32.totalorder %s56, %s57
      %p69 = scmp.eq.s32.totalorder %s26, 7
      %p70 = por %p68, %p69
      %p72 = scmp.ne.s32.totalorder %s57, %s71
      %p73 = scmp.eq.s32.totalorder %s26, 0
      %p74 = por %p72, %p73
      %s76 = sadd.s32 %s75, 1
      %p79 = scmp.eq.s32.totalorder %s20, 7
      %p80 = scmp.ne.s32.totalorder %s75, %s77
      %p81 = scmp.eq.s32.totalorder %s20, 0
      %p82 = por %p80, %p81
      %p83 = scmp.ne.s32.totalorder %s75, %s77
      %p84 = scmp.eq.s32.totalorder %s25, 7
      %p85 = por %p83, %p84
      %p86 = scmp.ne.s32.totalorder %s77, %s78
      %p87 = scmp.eq.s32.totalorder %s25, 0
      %p88 = por %p86, %p87
      %p89 = scmp.ne.s32.totalorder %s77, %s78
      %p90 = scmp.eq.s32.totalorder %s26, 7
      %p91 = por %p89, %p90
      %p93 = scmp.ne.s32.totalorder %s78, %s92
      %p94 = scmp.eq.s32.totalorder %s26, 0
      %p95 = por %p93, %p94
      %s97 = sadd.s32 %s96, 1
      %p100 = scmp.eq.s32.totalorder %s20, 7
      %p101 = scmp.ne.s32.totalorder %s96, %s98
      %p102 = scmp.eq.s32.totalorder %s20, 0
      %p103 = por %p101, %p102
      %p104 = scmp.ne.s32.totalorder %s96, %s98
      %p105 = scmp.eq.s32.totalorder %s25, 7
      %p106 = por %p104, %p105
      %p107 = scmp.ne.s32.totalorder %s98, %s99
      %p108 = scmp.eq.s32.totalorder %s25, 0
      %p109 = por %p107, %p108
      %p110 = scmp.ne.s32.totalorder %s98, %s99
      %p111 = scmp.eq.s32.totalorder %s26, 7
      %p112 = por %p110, %p111
      %p114 = scmp.ne.s32.totalorder %s99, %s113
      %p115 = scmp.eq.s32.totalorder %s26, 0
      %p116 = por %p114, %p115
      %s118 = sadd.s32 %s117, 1
      %p121 = scmp.eq.s32.totalorder %s20, 7
      %p122 = scmp.ne.s32.totalorder %s117, %s119
      %p123 = scmp.eq.s32.totalorder %s20, 0
      %p124 = por %p122, %p123
      %p125 = scmp.ne.s32.totalorder %s117, %s119
      %p126 = scmp.eq.s32.totalorder %s25, 7
      %p127 = por %p125, %p126
      %p128 = scmp.ne.s32.totalorder %s119, %s120
      %p129 = scmp.eq.s32.totalorder %s25, 0
      %p130 = por %p128, %p129
      %p131 = scmp.ne.s32.totalorder %s119, %s120
      %p132 = scmp.eq.s32.totalorder %s26, 7
      %p133 = por %p131, %p132
      %p135 = scmp.ne.s32.totalorder %s120, %s134
      %p136 = scmp.eq.s32.totalorder %s26, 0
      %p137 = por %p135, %p136
      %s139 = sadd.s32 %s138, 1
      %p142 = scmp.eq.s32.totalorder %s20, 7
      %p143 = scmp.ne.s32.totalorder %s138, %s140
      %p144 = scmp.eq.s32.totalorder %s20, 0
      %p145 = por %p143, %p144
      %p146 = scmp.ne.s32.totalorder %s138, %s140
      %p147 = scmp.eq.s32.totalorder %s25, 7
      %p148 = por %p146, %p147
      %p149 = scmp.ne.s32.totalorder %s140, %s141
      %p150 = scmp.eq.s32.totalorder %s25, 0
      %p151 = por %p149, %p150
      %p152 = scmp.ne.s32.totalorder %s140, %s141
      %p153 = scmp.eq.s32.totalorder %s26, 7
      %p154 = por %p152, %p153
      %p156 = scmp.ne.s32.totalorder %s141, %s155
      %p157 = scmp.eq.s32.totalorder %s26, 0
      %p158 = por %p156, %p157
      %s160 = sadd.s32 %s159, 1
      %p163 = scmp.eq.s32.totalorder %s20, 7
      %p164 = scmp.ne.s32.totalorder %s159, %s161
      %p165 = scmp.eq.s32.totalorder %s20, 0
      %p166 = por %p164, %p165
      %p167 = scmp.ne.s32.totalorder %s159, %s161
      %p168 = scmp.eq.s32.totalorder %s25, 7
      %p169 = por %p167, %p168
      %p170 = scmp.ne.s32.totalorder %s161, %s162
      %p171 = scmp.eq.s32.totalorder %s25, 0
      %p172 = por %p170, %p171
      %p173 = scmp.ne.s32.totalorder %s161, %s162
      %p174 = scmp.eq.s32.totalorder %s26, 7
      %p175 = por %p173, %p174
      %p177 = scmp.ne.s32.totalorder %s162, %s176
      %p178 = scmp.eq.s32.totalorder %s26, 0
      %p179 = por %p177, %p178
      %s181 = sadd.s32 %s180, 1
      %p184 = scmp.eq.s32.totalorder %s20, 7
      %p185 = scmp.ne.s32.totalorder %s180, %s182
      %p186 = scmp.eq.s32.totalorder %s20, 0
      %p187 = por %p185, %p186
      %p188 = scmp.ne.s32.totalorder %s180, %s182
      %p189 = scmp.eq.s32.totalorder %s25, 7
      %p190 = por %p188, %p189
      %p191 = scmp.ne.s32.totalorder %s182, %s183
      %p192 = scmp.eq.s32.totalorder %s25, 0
      %p193 = por %p191, %p192
      %p194 = scmp.ne.s32.totalorder %s182, %s183
      %p195 = scmp.eq.s32.totalorder %s26, 7
      %p196 = por %p194, %p195
      %p198 = scmp.ne.s32.totalorder %s183, %s197
      %p199 = scmp.eq.s32.totalorder %s26, 0
      %p200 = por %p198, %p199
      %s202 = sadd.s32 %s201, 1
      %p205 = scmp.eq.s32.totalorder %s20, 7
      %p206 = scmp.ne.s32.totalorder %s201, %s203
      %p207 = scmp.eq.s32.totalorder %s20, 0
      %p208 = por %p206, %p207
      %p209 = scmp.ne.s32.totalorder %s201, %s203
      %p210 = scmp.eq.s32.totalorder %s25, 7
      %p211 = por %p209, %p210
      %p212 = scmp.ne.s32.totalorder %s203, %s204
      %p213 = scmp.eq.s32.totalorder %s25, 0
      %p214 = por %p212, %p213
      %p215 = scmp.ne.s32.totalorder %s203, %s204
      %p216 = scmp.eq.s32.totalorder %s26, 7
      %p217 = por %p215, %p216
      %p219 = scmp.ne.s32.totalorder %s204, %s218
      %p220 = scmp.eq.s32.totalorder %s26, 0
      %p221 = por %p219, %p220
      %s222 = ssub.s32 %s20, %s27
      %p223 = scmp.eq.s32.totalorder %s222, 0
      %s225 = sadd.s32 %s224, 1
      %s226 = scalar_select %p223, %s224, %s225
      %p229 = pneg %p223
      %p230 = scmp.eq.s32.totalorder %s20, 7
      %p231 = por %p229, %p230
      %p232 = scmp.ne.s32.totalorder %s224, %s227
      %p233 = scmp.eq.s32.totalorder %s20, 0
      %p234 = por %p232, %p233
      %p235 = scmp.ne.s32.totalorder %s224, %s227
      %p236 = scmp.eq.s32.totalorder %s25, 7
      %p237 = por %p235, %p236
      %p238 = scmp.ne.s32.totalorder %s227, %s228
      %p239 = scmp.eq.s32.totalorder %s25, 0
      %p240 = por %p238, %p239
      %p241 = scmp.ne.s32.totalorder %s227, %s228
      %p242 = scmp.eq.s32.totalorder %s26, 7
      %p243 = por %p241, %p242
      %p245 = scmp.ne.s32.totalorder %s228, %s244
      %p246 = scmp.eq.s32.totalorder %s26, 0
      %p247 = por %p245, %p246
      %p248 = scmp.le.s32.totalorder 1, %s20
      %p249 = scmp.lt.s32.totalorder %s20, 9
      %p250 = pnand %p248, %p249
      %p251 = pneg %p250
      // Predicated region
      $region9: #{tpu_custom_call.1} parent=5 // pred_check
        _
      $region10: #{tpu_custom_call.1} parent=5 // pred_check_branch
        %253 = sbr.rel (%p250) target = $region12
      $region11: #{tpu_custom_call.1} parent=5 // pred_region
        %s254 = ssub.s32 %s20, 1
        // Predicated region
        $region13: #{tpu_custom_call.1} parent=11 // pred_check
          %p255 = pneg %p67
        $region14: #{tpu_custom_call.1} parent=11 // pred_check_branch
          %257 = sbr.rel (%p255) target = $region16
        $region15: #{tpu_custom_call.1} parent=11 // pred_region
          _
        $region16: #{tpu_custom_call.1} parent=11 // pred_fallthru
          _
        // Predicated region
        $region17: #{tpu_custom_call.1} parent=11 // pred_check
          %p258 = pneg %p88
        $region18: #{tpu_custom_call.1} parent=11 // pred_check_branch
          %260 = sbr.rel (%p258) target = $region20
        $region19: #{tpu_custom_call.1} parent=11 // pred_region
          _
        $region20: #{tpu_custom_call.1} parent=11 // pred_fallthru
          _
        // Predicated region
        $region21: #{tpu_custom_call.1} parent=11 // pred_check
          %p261 = pneg %p109
        $region22: #{tpu_custom_call.1} parent=11 // pred_check_branch
          %263 = sbr.rel (%p261) target = $region24
        $region23: #{tpu_custom_call.1} parent=11 // pred_region
          %s265 = ssub.s32 6144, 6144
          %266 = vsyncadd [#allocation4], %s265
          %s267 = sshll.u32 [#allocation3], 4
          %s268 = int_to_ptr.vmem [resolvable:$true] %s267
          %273 = dma.hbm_to_vmem [thread:$0]  %s3, 6144, %s268, [#allocation4], 384, 384, 24
        $region24: #{tpu_custom_call.1} parent=11 // pred_fallthru
          _
        // Predicated region
        $region25: #{tpu_custom_call.1} parent=11 // pred_check
          %p274 = pneg %p130
        $region26: #{tpu_custom_call.1} parent=11 // pred_check_branch
          %276 = sbr.rel (%p274) target = $region28
        $region27: #{tpu_custom_call.1} parent=11 // pred_region
          _
        $region28: #{tpu_custom_call.1} parent=11 // pred_fallthru
          _
        // Predicated region
        $region29: #{tpu_custom_call.1} parent=11 // pred_check
          %p277 = pneg %p151
        $region30: #{tpu_custom_call.1} parent=11 // pred_check_branch
          %279 = sbr.rel (%p277) target = $region32
        $region31: #{tpu_custom_call.1} parent=11 // pred_region
          %s281 = ssub.s32 2048, 2048
          %282 = vsyncadd [#allocation7], %s281
          %s283 = sshll.u32 [#allocation6], 4
          %s284 = int_to_ptr.vmem [resolvable:$true] %s283
          %289 = dma.hbm_to_vmem [thread:$0]  %s5, 2048, %s284, [#allocation7], 128, 128, 8
        $region32: #{tpu_custom_call.1} parent=11 // pred_fallthru
          _
        // Predicated region
        $region33: #{tpu_custom_call.1} parent=11 // pred_check
          %p290 = pneg %p172
        $region34: #{tpu_custom_call.1} parent=11 // pred_check_branch
          %292 = sbr.rel (%p290) target = $region36
        $region35: #{tpu_custom_call.1} parent=11 // pred_region
          _
        $region36: #{tpu_custom_call.1} parent=11 // pred_fallthru
          _
        // Predicated region
        $region37: #{tpu_custom_call.1} parent=11 // pred_check
          %p293 = pneg %p193
        $region38: #{tpu_custom_call.1} parent=11 // pred_check_branch
          %295 = sbr.rel (%p293) target = $region40
        $region39: #{tpu_custom_call.1} parent=11 // pred_region
          %s297 = ssub.s32 2048, 2048
          %298 = vsyncadd [#allocation7], %s297
          %s299 = sshll.u32 [#allocation8], 4
          %s300 = int_to_ptr.vmem [resolvable:$true] %s299
          %305 = dma.hbm_to_vmem [thread:$0]  %s7, 2048, %s300, [#allocation7], 128, 128, 8
        $region40: #{tpu_custom_call.1} parent=11 // pred_fallthru
          _
        // Predicated region
        $region41: #{tpu_custom_call.1} parent=11 // pred_check
          %p306 = pneg %p214
        $region42: #{tpu_custom_call.1} parent=11 // pred_check_branch
          %308 = sbr.rel (%p306) target = $region44
        $region43: #{tpu_custom_call.1} parent=11 // pred_region
          _
        $region44: #{tpu_custom_call.1} parent=11 // pred_fallthru
          _
      $region12: #{tpu_custom_call.1} parent=5 // pred_fallthru
        _
      %p309 = scmp.lt.s32.totalorder %s20, 8
      // Predicated region
      $region45: #{tpu_custom_call.1} parent=5 // pred_check
        %p310 = pneg %p309
      $region46: #{tpu_custom_call.1} parent=5 // pred_check_branch
        %312 = sbr.rel (%p310) target = $region48
      $region47: #{tpu_custom_call.1} parent=5 // pred_region
        // Predicated region
        $region49: #{tpu_custom_call.1} parent=47 // pred_check
          %p313 = pneg %p40
        $region50: #{tpu_custom_call.1} parent=47 // pred_check_branch
          %315 = sbr.rel (%p313) target = $region52
        $region51: #{tpu_custom_call.1} parent=47 // pred_region
          %p316 = scmp.lt.s32.totalorder %s20, 7
          %s317 = scalar_select %p316, %s20, 7
          %s318 = smul.addr %s317, 8
          %s319 = scalar_lea.vmem %s0, %s318
        $region52: #{tpu_custom_call.1} parent=47 // pred_fallthru
          _
      $region48: #{tpu_custom_call.1} parent=5 // pred_fallthru
        _
      %p320 = scmp.le.s32.totalorder 1, %s20
      %p321 = scmp.lt.s32.totalorder %s20, 9
      %p322 = pnand %p320, %p321
      %p323 = pneg %p322
      // Predicated region
      $region53: #{tpu_custom_call.1} parent=5 // pred_check
        _
      $region54: #{tpu_custom_call.1} parent=5 // pred_check_branch
        %325 = sbr.rel (%p322) target = $region56
      $region55: #{tpu_custom_call.1} parent=5 // pred_region
        %s326 = ssub.s32 %s20, 1
        // Predicated region
        $region57: #{tpu_custom_call.1} parent=55 // pred_check
          %p327 = pneg %p109
        $region58: #{tpu_custom_call.1} parent=55 // pred_check_branch
          %329 = sbr.rel (%p327) target = $region60
        $region59: #{tpu_custom_call.1} parent=55 // pred_region
          %330 = dma.done [#allocation4], 6144
        $region60: #{tpu_custom_call.1} parent=55 // pred_fallthru
          _
        // Predicated region
        $region61: #{tpu_custom_call.1} parent=55 // pred_check
          %p331 = pneg %p151
        $region62: #{tpu_custom_call.1} parent=55 // pred_check_branch
          %333 = sbr.rel (%p331) target = $region64
        $region63: #{tpu_custom_call.1} parent=55 // pred_region
          %334 = dma.done [#allocation7], 2048
        $region64: #{tpu_custom_call.1} parent=55 // pred_fallthru
          _
        // Predicated region
        $region65: #{tpu_custom_call.1} parent=55 // pred_check
          %p335 = pneg %p193
        $region66: #{tpu_custom_call.1} parent=55 // pred_check_branch
          %337 = sbr.rel (%p335) target = $region68
        $region67: #{tpu_custom_call.1} parent=55 // pred_region
          %338 = dma.done [#allocation7], 2048
        $region68: #{tpu_custom_call.1} parent=55 // pred_fallthru
          _
        %p339 = scmp.lt.s32.totalorder %s25, 7
        %s340 = scalar_select %p339, %s25, 7
        %s341 = smul.addr %s340, 8
        %s342 = scalar_lea.vmem %s0, %s341
        %p343 = pneg %p46
        %p344 = pneg %p43
        %p345 = pneg %p67
        %p346 = pneg %p64
        %p347 = pneg %p88
        %p348 = pneg %p85
        %p349 = pneg %p109
        %p350 = pneg %p106
        %p351 = pneg %p130
        %p352 = pneg %p127
        %p353 = pneg %p151
        %p354 = pneg %p148
        %p355 = pneg %p172
        %p356 = pneg %p169
        %p357 = pneg %p193
        %p358 = pneg %p190
        %p359 = pneg %p214
        %p360 = pneg %p211
        %p361 = pneg %p240
        %p362 = pneg %p237
        %s363 = sand.u32 %s227, 1
        %s364 = scalar_lea.sflag [#allocation5], %s363
        %s365 = sand.u32 %s227, 1
        %s366 = smul.addr %s365, 8
        %s367 = scalar_lea.vmem [#allocation9], %s366
        %p368 = scmp.lt.s32.totalorder %s25, 7
        %s369 = scalar_select %p368, %s25, 7
        %s370 = smul.addr %s369, 8
        %s371 = scalar_lea.vmem %s0, %s370
        %p372 = scmp.eq.s32.totalorder %s25, 0
        // Predicated region
        $region69: #{tpu_custom_call.1} parent=55 // pred_check
          %p373 = pneg %p372
        $region70: #{tpu_custom_call.1} parent=55 // pred_check_branch
          %375 = sbr.rel (%p373) target = $region72
        $region71: #{tpu_custom_call.1} parent=55 // pred_region
          %376 = vst [vmem:[#allocation2] sm:$0xff] 0.0
        $region72: #{tpu_custom_call.1} parent=55 // pred_fallthru
          _
        %v377 = vld [vmem:[%s371] sm:$0xff]
        %v378 = vld [vmem:[%s1] sm:$0x7]
        %380 = vset.pattern.permute.xlu0 0
        %381 = vperm.xlu0 %380, %v377
        %v382 = vpop.permute.xlu0 %381
        %v385 = vlaneseq
        %v386 = vshrl.u32 %v385, 7
        %v387 = vsub.s32 0, %v386
        %v388 = vrot.slane %v378, %v387
        %v389 = vlaneseq
        %v390 = vshrl.u32 %v389, 7
        %v391 = vsub.s32 1, %v390
        %v392 = vrot.slane %v378, %v391
        %v393 = vlaneseq
        %v394 = vshrl.u32 %v393, 7
        %v395 = vsub.s32 2, %v394
        %v396 = vrot.slane %v378, %v395
        %v400 = vmul.f32 %v382, %v388
        %v401 = vmul.f32 %v382, %v392
        %v402 = vmul.f32 %v382, %v396
        %v403 = vmul.f32 %v400, 256.0
        %v404 = vmul.f32 %v401, 256.0
        %v405 = vmul.f32 %v402, 256.0
        %v406 = vround.ne.pseudo %v403
        %v407 = vround.ne.pseudo %v404
        %v408 = vround.ne.pseudo %v405
        %v409 = vmax.f32 %v406, -32768.0
        %v410 = vmax.f32 %v407, -32768.0
        %v411 = vmax.f32 %v408, -32768.0
        %v412 = vmin.f32 %v409, 32767.0
        %v413 = vmin.f32 %v410, 32767.0
        %v414 = vmin.f32 %v411, 32767.0
        %v415 = vmul.f32 %v412, 0.00390625
        %v416 = vmul.f32 %v413, 0.00390625
        %v417 = vmul.f32 %v414, 0.00390625
        %v418 = vld [vmem:[%s2] sm:$0x7]
        %v420 = vlaneseq
        %v421 = vshrl.u32 %v420, 7
        %v422 = vsub.s32 0, %v421
        %v423 = vrot.slane %v418, %v422
        %v424 = vlaneseq
        %v425 = vshrl.u32 %v424, 7
        %v426 = vsub.s32 1, %v425
        %v427 = vrot.slane %v418, %v426
        %v428 = vlaneseq
        %v429 = vshrl.u32 %v428, 7
        %v430 = vsub.s32 2, %v429
        %v431 = vrot.slane %v418, %v430
        %v435 = vadd.f32 %v415, %v423
        %v436 = vadd.f32 %v416, %v427
        %v437 = vadd.f32 %v417, %v431
        %v438 = vmul.f32 %v435, 256.0
        %v439 = vmul.f32 %v436, 256.0
        %v440 = vmul.f32 %v437, 256.0
        %v441 = vround.ne.pseudo %v438
        %v442 = vround.ne.pseudo %v439
        %v443 = vround.ne.pseudo %v440
        %v444 = vmax.f32 %v441, -32768.0
        %v445 = vmax.f32 %v442, -32768.0
        %v446 = vmax.f32 %v443, -32768.0
        %v447 = vmin.f32 %v444, 32767.0
        %v448 = vmin.f32 %v445, 32767.0
        %v449 = vmin.f32 %v446, 32767.0
        %v450 = vmul.f32 %v447, 0.00390625
        %v451 = vmul.f32 %v448, 0.00390625
        %v452 = vmul.f32 %v449, 0.00390625
        %v453 = vld [vmem:[#allocation2] sm:$0xff]
        %v454 = vld [vmem:[#allocation3] sm:$0xff]
        %v455 = vld [vmem:[#allocation3 + $0x8] sm:$0xff]
        %v456 = vld [vmem:[#allocation3 + $0x10] sm:$0xff]
        %v457 = vld [vmem:[#allocation3 + $0x18] sm:$0xff]
        %v458 = vld [vmem:[#allocation3 + $0x20] sm:$0xff]
        %v459 = vld [vmem:[#allocation3 + $0x28] sm:$0xff]
        %v460 = vld [vmem:[#allocation3 + $0x30] sm:$0xff]
        %v461 = vld [vmem:[#allocation3 + $0x38] sm:$0xff]
        %v462 = vld [vmem:[#allocation3 + $0x40] sm:$0xff]
        %v463 = vld [vmem:[#allocation3 + $0x48] sm:$0xff]
        %v464 = vld [vmem:[#allocation3 + $0x50] sm:$0xff]
        %v465 = vld [vmem:[#allocation3 + $0x58] sm:$0xff]
        %v466 = vld [vmem:[#allocation3 + $0x60] sm:$0xff]
        %v467 = vld [vmem:[#allocation3 + $0x68] sm:$0xff]
        %v468 = vld [vmem:[#allocation3 + $0x70] sm:$0xff]
        %v469 = vld [vmem:[#allocation3 + $0x78] sm:$0xff]
        %v470 = vld [vmem:[#allocation3 + $0x80] sm:$0xff]
        %v471 = vld [vmem:[#allocation3 + $0x88] sm:$0xff]
        %v472 = vld [vmem:[#allocation3 + $0x90] sm:$0xff]
        %v473 = vld [vmem:[#allocation3 + $0x98] sm:$0xff]
        %v474 = vld [vmem:[#allocation3 + $0xa0] sm:$0xff]
        %v475 = vld [vmem:[#allocation3 + $0xa8] sm:$0xff]
        %v476 = vld [vmem:[#allocation3 + $0xb0] sm:$0xff]
        %v477 = vld [vmem:[#allocation3 + $0xb8] sm:$0xff]
        %v478 = vld [vmem:[#allocation3 + $0xc0] sm:$0xff]
        %v479 = vld [vmem:[#allocation3 + $0xc8] sm:$0xff]
        %v480 = vld [vmem:[#allocation3 + $0xd0] sm:$0xff]
        %v481 = vld [vmem:[#allocation3 + $0xd8] sm:$0xff]
        %v482 = vld [vmem:[#allocation3 + $0xe0] sm:$0xff]
        %v483 = vld [vmem:[#allocation3 + $0xe8] sm:$0xff]
        %v484 = vld [vmem:[#allocation3 + $0xf0] sm:$0xff]
        %v485 = vld [vmem:[#allocation3 + $0xf8] sm:$0xff]
        %v486 = vld [vmem:[#allocation3 + $0x100] sm:$0xff]
        %v487 = vld [vmem:[#allocation3 + $0x108] sm:$0xff]
        %v488 = vld [vmem:[#allocation3 + $0x110] sm:$0xff]
        %v489 = vld [vmem:[#allocation3 + $0x118] sm:$0xff]
        %v490 = vld [vmem:[#allocation3 + $0x120] sm:$0xff]
        %v491 = vld [vmem:[#allocation3 + $0x128] sm:$0xff]
        %v492 = vld [vmem:[#allocation3 + $0x130] sm:$0xff]
        %v493 = vld [vmem:[#allocation3 + $0x138] sm:$0xff]
        %v494 = vld [vmem:[#allocation3 + $0x140] sm:$0xff]
        %v495 = vld [vmem:[#allocation3 + $0x148] sm:$0xff]
        %v496 = vld [vmem:[#allocation3 + $0x150] sm:$0xff]
        %v497 = vld [vmem:[#allocation3 + $0x158] sm:$0xff]
        %v498 = vld [vmem:[#allocation3 + $0x160] sm:$0xff]
        %v499 = vld [vmem:[#allocation3 + $0x168] sm:$0xff]
        %v500 = vld [vmem:[#allocation3 + $0x170] sm:$0xff]
        %v501 = vld [vmem:[#allocation3 + $0x178] sm:$0xff]
        %502 = vmatprep.subr.mxu0 %v500
        %503 = vmatpush1.msra.mxu0 %v499
        %504 = vmatprep.subr.mxu0 %v497
        %505 = vmatpush1.msra.mxu0 %v496
        %506 = vmatprep.subr.mxu0 %v494
        %507 = vmatpush1.msra.mxu0 %v493
        %508 = vmatprep.subr.mxu0 %v491
        %509 = vmatpush1.msra.mxu0 %v490
        %510 = vmatprep.subr.mxu0 %v488
        %511 = vmatpush1.msra.mxu0 %v487
        %512 = vmatprep.subr.mxu0 %v485
        %513 = vmatpush1.msra.mxu0 %v484
        %514 = vmatprep.subr.mxu0 %v482
        %515 = vmatpush1.msra.mxu0 %v481
        %516 = vmatprep.subr.mxu0 %v479
        %517 = vmatpush1.msra.mxu0 %v478
        %518 = vmatprep.subr.mxu0 %v476
        %519 = vmatpush1.msra.mxu0 %v475
        %520 = vmatprep.subr.mxu0 %v473
        %521 = vmatpush1.msra.mxu0 %v472
        %522 = vmatprep.subr.mxu0 %v470
        %523 = vmatpush1.msra.mxu0 %v469
        %524 = vmatprep.subr.mxu0 %v467
        %525 = vmatpush1.msra.mxu0 %v466
        %526 = vmatprep.subr.mxu0 %v464
        %527 = vmatpush1.msra.mxu0 %v463
        %528 = vmatprep.subr.mxu0 %v461
        %529 = vmatpush1.msra.mxu0 %v460
        %530 = vmatprep.subr.mxu0 %v458
        %531 = vmatpush1.msra.mxu0 %v457
        %532 = vmatprep.subr.mxu0 %v455
        %533 = vmatpush1.msra.mxu0 %v454
        %534 = vmatprep.subr.mxu0 0.0
        %535 = vmatpush2.msra.mxu0 0.0
        %536 = vmatprep.subr.mxu0 0.0
        %537 = vmatpush2.msra.mxu0 0.0
        %538 = vmatprep.subr.mxu0 0.0
        %539 = vmatpush2.msra.mxu0 0.0
        %540 = vmatprep.subr.mxu0 0.0
        %541 = vmatpush2.msra.mxu0 0.0
        %542 = vmatprep.subr.mxu0 0.0
        %543 = vmatpush2.msra.mxu0 0.0
        %544 = vmatprep.subr.mxu0 0.0
        %545 = vmatpush2.msra.mxu0 0.0
        %546 = vmatprep.subr.mxu0 0.0
        %547 = vmatpush2.msra.mxu0 0.0
        %548 = vmatprep.subr.mxu0 0.0
        %549 = vmatpush2.msra.mxu0 0.0
        %550 = vmatprep.subr.mxu0 0.0
        %551 = vmatpush2.msra.mxu0 0.0
        %552 = vmatprep.subr.mxu0 0.0
        %553 = vmatpush2.msra.mxu0 0.0
        %554 = vmatprep.subr.mxu0 0.0
        %555 = vmatpush2.msra.mxu0 0.0
        %556 = vmatprep.subr.mxu0 0.0
        %557 = vmatpush2.msra.mxu0 0.0
        %558 = vmatprep.subr.mxu0 0.0
        %559 = vmatpush2.msra.mxu0 0.0
        %560 = vmatprep.subr.mxu0 0.0
        %561 = vmatpush2.msra.mxu0 0.0
        %562 = vmatprep.subr.mxu0 0.0
        %563 = vmatpush2.msra.mxu0 0.0
        %564 = vmatprep.subr.mxu0 0.0
        %565 = vmatpush2.msra.mxu0 0.0
        %566 = vmatprep.mubr.f32.mxu0 0.0
        %567 = vmatmul.mubr.f32.gmra.mxu0 %v453
        %v568 = vpop.f32.mrf.mxu0
        %v569 = vadd.f32 0.0, %v568
        %v570 = vpop.f32.mrf.mxu0
        %v571 = vadd.f32 0.0, %v570
        %572 = vdwg.mxu0
        %573 = vmatprep.subr.mxu0 0.0
        %574 = vmatpush1.msra.mxu0 %v501
        %575 = vmatprep.subr.mxu0 0.0
        %576 = vmatpush1.msra.mxu0 %v498
        %577 = vmatprep.subr.mxu0 0.0
        %578 = vmatpush1.msra.mxu0 %v495
        %579 = vmatprep.subr.mxu0 0.0
        %580 = vmatpush1.msra.mxu0 %v492
        %581 = vmatprep.subr.mxu0 0.0
        %582 = vmatpush1.msra.mxu0 %v489
        %583 = vmatprep.subr.mxu0 0.0
        %584 = vmatpush1.msra.mxu0 %v486
        %585 = vmatprep.subr.mxu0 0.0
        %586 = vmatpush1.msra.mxu0 %v483
        %587 = vmatprep.subr.mxu0 0.0
        %588 = vmatpush1.msra.mxu0 %v480
        %589 = vmatprep.subr.mxu0 0.0
        %590 = vmatpush1.msra.mxu0 %v477
        %591 = vmatprep.subr.mxu0 0.0
        %592 = vmatpush1.msra.mxu0 %v474
        %593 = vmatprep.subr.mxu0 0.0
        %594 = vmatpush1.msra.mxu0 %v471
        %595 = vmatprep.subr.mxu0 0.0
        %596 = vmatpush1.msra.mxu0 %v468
        %597 = vmatprep.subr.mxu0 0.0
        %598 = vmatpush1.msra.mxu0 %v465
        %599 = vmatprep.subr.mxu0 0.0
        %600 = vmatpush1.msra.mxu0 %v462
        %601 = vmatprep.subr.mxu0 0.0
        %602 = vmatpush1.msra.mxu0 %v459
        %603 = vmatprep.subr.mxu0 0.0
        %604 = vmatpush1.msra.mxu0 %v456
        %605 = vmatprep.subr.mxu0 0.0
        %606 = vmatpush2.msra.mxu0 0.0
        %607 = vmatprep.subr.mxu0 0.0
        %608 = vmatpush2.msra.mxu0 0.0
        %609 = vmatprep.subr.mxu0 0.0
        %610 = vmatpush2.msra.mxu0 0.0
        %611 = vmatprep.subr.mxu0 0.0
        %612 = vmatpush2.msra.mxu0 0.0
        %613 = vmatprep.subr.mxu0 0.0
        %614 = vmatpush2.msra.mxu0 0.0
        %615 = vmatprep.subr.mxu0 0.0
        %616 = vmatpush2.msra.mxu0 0.0
        %617 = vmatprep.subr.mxu0 0.0
        %618 = vmatpush2.msra.mxu0 0.0
        %619 = vmatprep.subr.mxu0 0.0
        %620 = vmatpush2.msra.mxu0 0.0
        %621 = vmatprep.subr.mxu0 0.0
        %622 = vmatpush2.msra.mxu0 0.0
        %623 = vmatprep.subr.mxu0 0.0
        %624 = vmatpush2.msra.mxu0 0.0
        %625 = vmatprep.subr.mxu0 0.0
        %626 = vmatpush2.msra.mxu0 0.0
        %627 = vmatprep.subr.mxu0 0.0
        %628 = vmatpush2.msra.mxu0 0.0
        %629 = vmatprep.subr.mxu0 0.0
        %630 = vmatpush2.msra.mxu0 0.0
        %631 = vmatprep.subr.mxu0 0.0
        %632 = vmatpush2.msra.mxu0 0.0
        %633 = vmatprep.subr.mxu0 0.0
        %634 = vmatpush2.msra.mxu0 0.0
        %635 = vmatprep.subr.mxu0 0.0
        %636 = vmatpush2.msra.mxu0 0.0
        %637 = vmatprep.mubr.f32.mxu0 0.0
        %638 = vmatmul.mubr.f32.gmra.mxu0 %v453
        %v639 = vpop.f32.mrf.mxu0
        %v640 = vadd.f32 0.0, %v639
        %v641 = vpop.f32.mrf.mxu0
        %642 = vdwg.mxu0
        %v643 = vmul.f32 %v569, 256.0
        %v644 = vmul.f32 %v571, 256.0
        %v645 = vmul.f32 %v640, 256.0
        %v646 = vround.ne.pseudo %v643
        %v647 = vround.ne.pseudo %v644
        %v648 = vround.ne.pseudo %v645
        %v649 = vmax.f32 %v646, -32768.0
        %v650 = vmax.f32 %v647, -32768.0
        %v651 = vmax.f32 %v648, -32768.0
        %v652 = vmin.f32 %v649, 32767.0
        %v653 = vmin.f32 %v650, 32767.0
        %v654 = vmin.f32 %v651, 32767.0
        %v655 = vmul.f32 %v652, 0.00390625
        %v656 = vmul.f32 %v653, 0.00390625
        %v657 = vmul.f32 %v654, 0.00390625
        %v658 = vld [vmem:[%s4] sm:$0x7]
        %v660 = vlaneseq
        %v661 = vshrl.u32 %v660, 7
        %v662 = vsub.s32 0, %v661
        %v663 = vrot.slane %v658, %v662
        %v664 = vlaneseq
        %v665 = vshrl.u32 %v664, 7
        %v666 = vsub.s32 1, %v665
        %v667 = vrot.slane %v658, %v666
        %v668 = vlaneseq
        %v669 = vshrl.u32 %v668, 7
        %v670 = vsub.s32 2, %v669
        %v671 = vrot.slane %v658, %v670
        %v675 = vadd.f32 %v655, %v663
        %v676 = vadd.f32 %v656, %v667
        %v677 = vadd.f32 %v657, %v671
        %v678 = vmul.f32 %v675, 256.0
        %v679 = vmul.f32 %v676, 256.0
        %v680 = vmul.f32 %v677, 256.0
        %v681 = vround.ne.pseudo %v678
        %v682 = vround.ne.pseudo %v679
        %v683 = vround.ne.pseudo %v680
        %v684 = vmax.f32 %v681, -32768.0
        %v685 = vmax.f32 %v682, -32768.0
        %v686 = vmax.f32 %v683, -32768.0
        %v687 = vmin.f32 %v684, 32767.0
        %v688 = vmin.f32 %v685, 32767.0
        %v689 = vmin.f32 %v686, 32767.0
        %v690 = vmul.f32 %v687, 0.00390625
        %v691 = vmul.f32 %v688, 0.00390625
        %v692 = vmul.f32 %v689, 0.00390625
        %v693 = vadd.f32 %v450, %v690
        %v694 = vmul.f32 %v693, 0.25
        %v695 = vadd.f32 %v694, 0.5
        %v696 = vmax.f32 %v695, 0.0
        %v697 = vmin.f32 %v696, 1.0
        %v698 = vmul.f32 %v697, 256.0
        %v699 = vround.ne.pseudo %v698
        %v700 = vmax.f32 %v699, -32768.0
        %v701 = vmin.f32 %v700, 32767.0
        %v702 = vmul.f32 %v701, 0.00390625
        %v703 = vadd.f32 %v451, %v691
        %v704 = vmul.f32 %v703, 0.25
        %v705 = vadd.f32 %v704, 0.5
        %v706 = vmax.f32 %v705, 0.0
        %v707 = vmin.f32 %v706, 1.0
        %v708 = vmul.f32 %v707, 256.0
        %v709 = vround.ne.pseudo %v708
        %v710 = vmax.f32 %v709, -32768.0
        %v711 = vmin.f32 %v710, 32767.0
        %v712 = vmul.f32 %v711, 0.00390625
        %v713 = vmul.f32 %v702, %v692
        %v714 = vadd.f32 %v452, %v713
        %v715 = vmax.f32 %v714, -1.0
        %v716 = vmin.f32 %v715, 1.0
        %v717 = vmul.f32 %v716, 256.0
        %v718 = vround.ne.pseudo %v717
        %v719 = vmax.f32 %v718, -32768.0
        %v720 = vmin.f32 %v719, 32767.0
        %v721 = vmul.f32 %v720, 0.00390625
        %v722 = vsub.f32 1.0, %v712
        %v723 = vmul.f32 %v722, %v721
        %v724 = vmul.f32 %v712, %v453
        %v725 = vadd.f32 %v723, %v724
        %v726 = vmul.f32 %v725, 256.0
        %v727 = vround.ne.pseudo %v726
        %v728 = vmax.f32 %v727, -32768.0
        %v729 = vmin.f32 %v728, 32767.0
        %v730 = vmul.f32 %v729, 0.00390625
        %731 = vst [vmem:[#allocation2] sm:$0xff] %v730
        %v732 = vld [vmem:[#allocation6] sm:$0xff]
        %v733 = vld [vmem:[#allocation6 + $0x8] sm:$0xff]
        %v734 = vld [vmem:[#allocation6 + $0x10] sm:$0xff]
        %v735 = vld [vmem:[#allocation6 + $0x18] sm:$0xff]
        %v736 = vld [vmem:[#allocation6 + $0x20] sm:$0xff]
        %v737 = vld [vmem:[#allocation6 + $0x28] sm:$0xff]
        %v738 = vld [vmem:[#allocation6 + $0x30] sm:$0xff]
        %v739 = vld [vmem:[#allocation6 + $0x38] sm:$0xff]
        %v740 = vld [vmem:[#allocation6 + $0x40] sm:$0xff]
        %v741 = vld [vmem:[#allocation6 + $0x48] sm:$0xff]
        %v742 = vld [vmem:[#allocation6 + $0x50] sm:$0xff]
        %v743 = vld [vmem:[#allocation6 + $0x58] sm:$0xff]
        %v744 = vld [vmem:[#allocation6 + $0x60] sm:$0xff]
        %v745 = vld [vmem:[#allocation6 + $0x68] sm:$0xff]
        %v746 = vld [vmem:[#allocation6 + $0x70] sm:$0xff]
        %v747 = vld [vmem:[#allocation6 + $0x78] sm:$0xff]
        %748 = vmatprep.subr.mxu0 0.0
        %749 = vmatpush1.msra.mxu0 %v747
        %750 = vmatprep.subr.mxu0 0.0
        %751 = vmatpush1.msra.mxu0 %v746
        %752 = vmatprep.subr.mxu0 0.0
        %753 = vmatpush1.msra.mxu0 %v745
        %754 = vmatprep.subr.mxu0 0.0
        %755 = vmatpush1.msra.mxu0 %v744
        %756 = vmatprep.subr.mxu0 0.0
        %757 = vmatpush1.msra.mxu0 %v743
        %758 = vmatprep.subr.mxu0 0.0
        %759 = vmatpush1.msra.mxu0 %v742
        %760 = vmatprep.subr.mxu0 0.0
        %761 = vmatpush1.msra.mxu0 %v741
        %762 = vmatprep.subr.mxu0 0.0
        %763 = vmatpush1.msra.mxu0 %v740
        %764 = vmatprep.subr.mxu0 0.0
        %765 = vmatpush1.msra.mxu0 %v739
        %766 = vmatprep.subr.mxu0 0.0
        %767 = vmatpush1.msra.mxu0 %v738
        %768 = vmatprep.subr.mxu0 0.0
        %769 = vmatpush1.msra.mxu0 %v737
        %770 = vmatprep.subr.mxu0 0.0
        %771 = vmatpush1.msra.mxu0 %v736
        %772 = vmatprep.subr.mxu0 0.0
        %773 = vmatpush1.msra.mxu0 %v735
        %774 = vmatprep.subr.mxu0 0.0
        %775 = vmatpush1.msra.mxu0 %v734
        %776 = vmatprep.subr.mxu0 0.0
        %777 = vmatpush1.msra.mxu0 %v733
        %778 = vmatprep.subr.mxu0 0.0
        %779 = vmatpush1.msra.mxu0 %v732
        %780 = vmatprep.subr.mxu0 0.0
        %781 = vmatpush2.msra.mxu0 0.0
        %782 = vmatprep.subr.mxu0 0.0
        %783 = vmatpush2.msra.mxu0 0.0
        %784 = vmatprep.subr.mxu0 0.0
        %785 = vmatpush2.msra.mxu0 0.0
        %786 = vmatprep.subr.mxu0 0.0
        %787 = vmatpush2.msra.mxu0 0.0
        %788 = vmatprep.subr.mxu0 0.0
        %789 = vmatpush2.msra.mxu0 0.0
        %790 = vmatprep.subr.mxu0 0.0
        %791 = vmatpush2.msra.mxu0 0.0
        %792 = vmatprep.subr.mxu0 0.0
        %793 = vmatpush2.msra.mxu0 0.0
        %794 = vmatprep.subr.mxu0 0.0
        %795 = vmatpush2.msra.mxu0 0.0
        %796 = vmatprep.subr.mxu0 0.0
        %797 = vmatpush2.msra.mxu0 0.0
        %798 = vmatprep.subr.mxu0 0.0
        %799 = vmatpush2.msra.mxu0 0.0
        %800 = vmatprep.subr.mxu0 0.0
        %801 = vmatpush2.msra.mxu0 0.0
        %802 = vmatprep.subr.mxu0 0.0
        %803 = vmatpush2.msra.mxu0 0.0
        %804 = vmatprep.subr.mxu0 0.0
        %805 = vmatpush2.msra.mxu0 0.0
        %806 = vmatprep.subr.mxu0 0.0
        %807 = vmatpush2.msra.mxu0 0.0
        %808 = vmatprep.subr.mxu0 0.0
        %809 = vmatpush2.msra.mxu0 0.0
        %810 = vmatprep.subr.mxu0 0.0
        %811 = vmatpush2.msra.mxu0 0.0
        %812 = vmatprep.mubr.f32.mxu0 0.0
        %813 = vmatmul.mubr.f32.gmra.mxu0 %v730
        %v814 = vpop.f32.mrf.mxu0
        %v815 = vadd.f32 0.0, %v814
        %v816 = vpop.f32.mrf.mxu0
        %817 = vdwg.mxu0
        %v818 = vmul.f32 %v815, 256.0
        %v819 = vround.ne.pseudo %v818
        %v820 = vmax.f32 %v819, -32768.0
        %v821 = vmin.f32 %v820, 32767.0
        %v822 = vmul.f32 %v821, 0.00390625
        %v823 = vld [vmem:[%s6] sm:$0x1]
        %v825 = vlaneseq
        %v826 = vshrl.u32 %v825, 7
        %v827 = vsub.s32 0, %v826
        %v828 = vrot.slane %v823, %v827
        %v830 = vadd.f32 %v822, %v828
        %v831 = vmul.f32 %v830, 256.0
        %v832 = vround.ne.pseudo %v831
        %v833 = vmax.f32 %v832, -32768.0
        %v834 = vmin.f32 %v833, 32767.0
        %v835 = vmul.f32 %v834, 0.00390625
        %v836 = vmul.f32 %v835, 256.0
        %v837 = vround.ne.pseudo %v836
        %v838 = vmax.f32 %v837, -32768.0
        %v839 = vmin.f32 %v838, 32767.0
        %v840 = vmul.f32 %v839, 0.00390625
        %v841 = vmax.f32 %v840, 0.0
        %v842 = vld [vmem:[#allocation8] sm:$0xff]
        %v843 = vld [vmem:[#allocation8 + $0x8] sm:$0xff]
        %v844 = vld [vmem:[#allocation8 + $0x10] sm:$0xff]
        %v845 = vld [vmem:[#allocation8 + $0x18] sm:$0xff]
        %v846 = vld [vmem:[#allocation8 + $0x20] sm:$0xff]
        %v847 = vld [vmem:[#allocation8 + $0x28] sm:$0xff]
        %v848 = vld [vmem:[#allocation8 + $0x30] sm:$0xff]
        %v849 = vld [vmem:[#allocation8 + $0x38] sm:$0xff]
        %v850 = vld [vmem:[#allocation8 + $0x40] sm:$0xff]
        %v851 = vld [vmem:[#allocation8 + $0x48] sm:$0xff]
        %v852 = vld [vmem:[#allocation8 + $0x50] sm:$0xff]
        %v853 = vld [vmem:[#allocation8 + $0x58] sm:$0xff]
        %v854 = vld [vmem:[#allocation8 + $0x60] sm:$0xff]
        %v855 = vld [vmem:[#allocation8 + $0x68] sm:$0xff]
        %v856 = vld [vmem:[#allocation8 + $0x70] sm:$0xff]
        %v857 = vld [vmem:[#allocation8 + $0x78] sm:$0xff]
        %858 = vmatprep.subr.mxu0 0.0
        %859 = vmatpush1.msra.mxu0 %v857
        %860 = vmatprep.subr.mxu0 0.0
        %861 = vmatpush1.msra.mxu0 %v856
        %862 = vmatprep.subr.mxu0 0.0
        %863 = vmatpush1.msra.mxu0 %v855
        %864 = vmatprep.subr.mxu0 0.0
        %865 = vmatpush1.msra.mxu0 %v854
        %866 = vmatprep.subr.mxu0 0.0
        %867 = vmatpush1.msra.mxu0 %v853
        %868 = vmatprep.subr.mxu0 0.0
        %869 = vmatpush1.msra.mxu0 %v852
        %870 = vmatprep.subr.mxu0 0.0
        %871 = vmatpush1.msra.mxu0 %v851
        %872 = vmatprep.subr.mxu0 0.0
        %873 = vmatpush1.msra.mxu0 %v850
        %874 = vmatprep.subr.mxu0 0.0
        %875 = vmatpush1.msra.mxu0 %v849
        %876 = vmatprep.subr.mxu0 0.0
        %877 = vmatpush1.msra.mxu0 %v848
        %878 = vmatprep.subr.mxu0 0.0
        %879 = vmatpush1.msra.mxu0 %v847
        %880 = vmatprep.subr.mxu0 0.0
        %881 = vmatpush1.msra.mxu0 %v846
        %882 = vmatprep.subr.mxu0 0.0
        %883 = vmatpush1.msra.mxu0 %v845
        %884 = vmatprep.subr.mxu0 0.0
        %885 = vmatpush1.msra.mxu0 %v844
        %886 = vmatprep.subr.mxu0 0.0
        %887 = vmatpush1.msra.mxu0 %v843
        %888 = vmatprep.subr.mxu0 0.0
        %889 = vmatpush1.msra.mxu0 %v842
        %890 = vmatprep.subr.mxu0 0.0
        %891 = vmatpush2.msra.mxu0 0.0
        %892 = vmatprep.subr.mxu0 0.0
        %893 = vmatpush2.msra.mxu0 0.0
        %894 = vmatprep.subr.mxu0 0.0
        %895 = vmatpush2.msra.mxu0 0.0
        %896 = vmatprep.subr.mxu0 0.0
        %897 = vmatpush2.msra.mxu0 0.0
        %898 = vmatprep.subr.mxu0 0.0
        %899 = vmatpush2.msra.mxu0 0.0
        %900 = vmatprep.subr.mxu0 0.0
        %901 = vmatpush2.msra.mxu0 0.0
        %902 = vmatprep.subr.mxu0 0.0
        %903 = vmatpush2.msra.mxu0 0.0
        %904 = vmatprep.subr.mxu0 0.0
        %905 = vmatpush2.msra.mxu0 0.0
        %906 = vmatprep.subr.mxu0 0.0
        %907 = vmatpush2.msra.mxu0 0.0
        %908 = vmatprep.subr.mxu0 0.0
        %909 = vmatpush2.msra.mxu0 0.0
        %910 = vmatprep.subr.mxu0 0.0
        %911 = vmatpush2.msra.mxu0 0.0
        %912 = vmatprep.subr.mxu0 0.0
        %913 = vmatpush2.msra.mxu0 0.0
        %914 = vmatprep.subr.mxu0 0.0
        %915 = vmatpush2.msra.mxu0 0.0
        %916 = vmatprep.subr.mxu0 0.0
        %917 = vmatpush2.msra.mxu0 0.0
        %918 = vmatprep.subr.mxu0 0.0
        %919 = vmatpush2.msra.mxu0 0.0
        %920 = vmatprep.subr.mxu0 0.0
        %921 = vmatpush2.msra.mxu0 0.0
        %922 = vmatprep.mubr.f32.mxu0 0.0
        %923 = vmatmul.mubr.f32.gmra.mxu0 %v841
        %v924 = vpop.f32.mrf.mxu0
        %v925 = vadd.f32 0.0, %v924
        %v926 = vpop.f32.mrf.mxu0
        %927 = vdwg.mxu0
        %v928 = vmul.f32 %v925, 256.0
        %v929 = vround.ne.pseudo %v928
        %v930 = vmax.f32 %v929, -32768.0
        %v931 = vmin.f32 %v930, 32767.0
        %v932 = vmul.f32 %v931, 0.00390625
        %v933 = vld [vmem:[%s8] sm:$0x1]
        %v935 = vlaneseq
        %v936 = vshrl.u32 %v935, 7
        %v937 = vsub.s32 0, %v936
        %v938 = vrot.slane %v933, %v937
        %v940 = vadd.f32 %v932, %v938
        %v941 = vmul.f32 %v940, 256.0
        %v942 = vround.ne.pseudo %v941
        %v943 = vmax.f32 %v942, -32768.0
        %v944 = vmin.f32 %v943, 32767.0
        %v945 = vmul.f32 %v944, 0.00390625
        %v946 = vmul.f32 %v945, 256.0
        %v947 = vround.ne.pseudo %v946
        %v948 = vmax.f32 %v947, -32768.0
        %v949 = vmin.f32 %v948, 32767.0
        %v950 = vmul.f32 %v949, 0.00390625
        %951 = vst [vmem:[%s367] sm:$0xff] %v950
        %s952 = sand.u32 %s227, 1
        %s953 = scalar_lea.sflag [#allocation5], %s952
        %s954 = sand.u32 %s227, 1
        %s955 = smul.addr %s954, 8
        %s956 = scalar_lea.vmem [#allocation9], %s955
        // Predicated region
        $region73: #{tpu_custom_call.1} parent=55 // pred_check
          %p957 = pneg %p237
        $region74: #{tpu_custom_call.1} parent=55 // pred_check_branch
          %959 = sbr.rel (%p957) target = $region76
        $region75: #{tpu_custom_call.1} parent=55 // pred_region
          %s961 = ssub.s32 128, 128
          %962 = vsyncadd %s953, %s961
          %s963 = smul.addr %s25, 128
          %s964 = scalar_lea.hbm %s9, %s963
          %s966 = sshll.u32 %s956, 4
          %s967 = int_to_ptr.vmem [resolvable:$true] %s966
          %969 = dma.vmem_to_hbm [thread:$0]  %s967, 128, %s964, %s953
        $region76: #{tpu_custom_call.1} parent=55 // pred_fallthru
          _
      $region56: #{tpu_custom_call.1} parent=5 // pred_fallthru
        _
      %p970 = scmp.le.s32.totalorder 2, %s20
      // Predicated region
      $region77: #{tpu_custom_call.1} parent=5 // pred_check
        %p971 = pneg %p970
      $region78: #{tpu_custom_call.1} parent=5 // pred_check_branch
        %973 = sbr.rel (%p971) target = $region80
      $region79: #{tpu_custom_call.1} parent=5 // pred_region
        %s974 = ssub.s32 %s20, 2
        // Predicated region
        $region81: #{tpu_custom_call.1} parent=79 // pred_check
          %p975 = pneg %p243
        $region82: #{tpu_custom_call.1} parent=79 // pred_check_branch
          %977 = sbr.rel (%p975) target = $region84
        $region83: #{tpu_custom_call.1} parent=79 // pred_region
          %s978 = sand.u32 %s228, 1
          %s979 = scalar_lea.sflag [#allocation5], %s978
          %s980 = sand.u32 %s228, 1
          %s981 = smul.addr %s980, 8
          %s982 = scalar_lea.vmem [#allocation9], %s981
          %983 = dma.done %s979, 128
        $region84: #{tpu_custom_call.1} parent=79 // pred_fallthru
          _
      $region80: #{tpu_custom_call.1} parent=5 // pred_fallthru
        _
    $region6: #{tpu_custom_call.1} parent=1 // loop_footer
      %s24 = sadd.s32 1, %s20
    $region7: #{tpu_custom_call.1} parent=1 // loop_footer_branch
      %19 = sbr.rel target = $region3
    $region8: #{tpu_custom_call.1} parent=1 // loop_exit
      _
    %984 = vsyncpa [#allocation4], 1
    %s985 = scalar_lea.sflag [#allocation4], 1
    %986 = vsyncpa %s985, 1
    %987 = vsyncpa [#allocation7], 1
    %988 = vsyncpa [#allocation5], 1
    %s989 = scalar_lea.sflag [#allocation5], 1
    %990 = vsyncpa %s989, 1

</llo_original>
